<compile_context>
chip_gen: v7x
topology: tpu7x:2x2x1
jax: 0.10.0
libtpu: 0.0.40
codegen_flags: <defaults>
</compile_context>

<pallas_src>
import functools

import jax
import jax.numpy as jnp
from jax.experimental import pallas as pl
from jax.experimental.pallas import tpu as pltpu

NEG_SLOPE = 0.01   # F.leaky_relu default negative_slope
BN_EPS = 1e-5      # nn.BatchNorm2d default eps
COUT_PAD = 128     # zero-padded output channels -> lane-dense output blocks


def _conv_tile(x_ref, w_ref, *, t, kh_total, tile_h, w_out, kwc, stride):
    """Conv output for one row tile, as (tile_h*w_out, COUT_PAD) f32.

    x_ref: (Hp, W_out, KW*Cin)      bf16  KW-folded, zero-padded image
    w_ref: (KH, KW*Cin, COUT_PAD)   bf16  folded weights
    """
    row0 = pl.multiple_of(t * (tile_h * stride), tile_h * stride)
    acc = None
    for kh in range(kh_total):
        if stride == 1:
            xs = x_ref[pl.ds(row0 + kh, tile_h), :, :]
        else:
            xs = x_ref[pl.ds(row0 + kh, tile_h, stride), :, :]
        xs2 = xs.reshape(tile_h * w_out, kwc)            # sublane-only merge (lanes kept)
        part = jnp.dot(xs2, w_ref[kh], preferred_element_type=jnp.float32)
        acc = part if acc is None else acc + part        # register-level add chain
    return acc


def _stats_kernel(x_ref, w_ref, stats_ref, *, kh_total, tile_h, w_out, kwc, stride):
    """Per-tile partial BN statistics: row 0 = sum, row 1 = sum of squares."""
    t = pl.program_id(1)
    acc = _conv_tile(x_ref, w_ref, t=t, kh_total=kh_total, tile_h=tile_h,
                     w_out=w_out, kwc=kwc, stride=stride)
    stats_ref[...] = jnp.zeros(stats_ref.shape, jnp.float32)
    stats_ref[0:1, :] = jnp.sum(acc, axis=0, keepdims=True)
    stats_ref[1:2, :] = jnp.sum(acc * acc, axis=0, keepdims=True)


def _normalize_kernel(x_ref, w_ref, scale_ref, shift_ref, out_ref, *,
                      kh_total, tile_h, w_out, kwc, stride):
    """Recompute the conv tile, apply BN affine + LeakyReLU, store bf16."""
    t = pl.program_id(1)
    acc = _conv_tile(x_ref, w_ref, t=t, kh_total=kh_total, tile_h=tile_h,
                     w_out=w_out, kwc=kwc, stride=stride)
    y = acc * scale_ref[...] + shift_ref[...]            # f32 epilogue
    y = jnp.where(y >= 0, y, NEG_SLOPE * y)
    out_ref[...] = y.astype(out_ref.dtype)               # bf16 only at the final store


def _pick_tile_h(h_out, w_out, max_rows=512):
    """Largest divisor of H_out with tile_h*W_out <= max_rows and sublane-aligned."""
    best = None
    for th in range(1, h_out + 1):
        if h_out % th != 0:
            continue
        rows = th * w_out
        if rows <= max_rows and rows % 8 == 0:
            best = th
    if best is None:
        # TODO(synk): support ragged spatial tiles where tile_h*W_out % 8 != 0.
        raise ValueError("no valid row tile: need (tile_h * W_out) % 8 == 0")
    return best


def conv_bn_relu(x_nchw, w_oihw, gamma, beta, stride=1, pad=1, *, max_rows=512):
    """Fused Conv2d(no bias) + train-mode BatchNorm2d + LeakyReLU (forward only)."""
    n, cin, h, w = x_nchw.shape
    cout, cin_w, kh, kw = w_oihw.shape
    assert cin == cin_w and cout <= COUT_PAD

    h_out = (h + 2 * pad - kh) // stride + 1
    w_out = (w + 2 * pad - kw) // stride + 1
    m_total = n * h_out * w_out
    kwc = kw * cin
    hp = h + 2 * pad

    # NCHW -> NHWC, zero-pad, then KW-fold so lanes hold (kw, cin) and sublanes hold W_out.
    xp = jnp.transpose(x_nchw, (0, 2, 3, 1)).astype(jnp.float32)
    xp = jnp.pad(xp, ((0, 0), (pad, pad), (pad, pad), (0, 0)))
    cols = [xp[:, :, k0:k0 + (w_out - 1) * stride + 1:stride, :] for k0 in range(kw)]
    xkw = jnp.concatenate(cols, axis=-1).astype(jnp.bfloat16)    # (N, Hp, W_out, KW*Cin)

    # (Cout, Cin, KH, KW) -> (KH, KW*Cin, COUT_PAD), bf16, zero-padded channels.
    w_f = jnp.transpose(w_oihw, (2, 3, 1, 0)).reshape(kh, kwc, cout)
    w_f = jnp.pad(w_f, ((0, 0), (0, 0), (0, COUT_PAD - cout))).astype(jnp.bfloat16)

    tile_h = _pick_tile_h(h_out, w_out, max_rows)
    n_row_tiles = h_out // tile_h
    tile_rows = tile_h * w_out
    n_tiles = n * n_row_tiles

    common = dict(kh_total=kh, tile_h=tile_h, w_out=w_out, kwc=kwc, stride=stride)

    x_spec = pl.BlockSpec((None, hp, w_out, kwc), lambda b, t: (b, 0, 0, 0))
    w_spec = pl.BlockSpec((kh, kwc, COUT_PAD), lambda b, t: (0, 0, 0))

    conv_flops = 2 * m_total * (kh * kwc) * COUT_PAD
    x_bytes = xkw.size * 2
    w_bytes = w_f.size * 2

    # ---- call 1: per-tile partial sum / sum-of-squares (fully parallel grid) ----
    stats = pl.pallas_call(
        functools.partial(_stats_kernel, **common),
        grid=(n, n_row_tiles),
        in_specs=[x_spec, w_spec],
        out_specs=pl.BlockSpec((None, 8, COUT_PAD),
                               lambda b, t: (b * n_row_tiles + t, 0, 0)),
        out_shape=jax.ShapeDtypeStruct((n_tiles, 8, COUT_PAD), jnp.float32),
        compiler_params=pltpu.CompilerParams(
            dimension_semantics=("parallel", "parallel"),
            vmem_limit_bytes=32 * 1024 * 1024),
        cost_estimate=pl.CostEstimate(
            flops=conv_flops, transcendentals=0,
            bytes_accessed=x_bytes + w_bytes + n_tiles * 8 * COUT_PAD * 4),
    )(xkw, w_f)

    # Finalize batch statistics (tiny; XLA does the cross-tile reduction).
    inv_count = 1.0 / float(m_total)
    sum_c = jnp.sum(stats[:, 0, :], axis=0)
    sumsq_c = jnp.sum(stats[:, 1, :], axis=0)
    mean = sum_c * inv_count
    var = jnp.maximum(sumsq_c * inv_count - mean * mean, 0.0)   # biased var (BN train mode)
    inv_std = jax.lax.rsqrt(var + BN_EPS)
    gamma_p = jnp.pad(gamma.astype(jnp.float32), (0, COUT_PAD - cout))
    beta_p = jnp.pad(beta.astype(jnp.float32), (0, COUT_PAD - cout))
    scale = (gamma_p * inv_std).reshape(1, COUT_PAD)
    shift = (beta_p - mean * gamma_p * inv_std).reshape(1, COUT_PAD)

    # ---- call 2: recompute conv, apply BN affine + LeakyReLU, store bf16 ----
    out = pl.pallas_call(
        functools.partial(_normalize_kernel, **common),
        grid=(n, n_row_tiles),
        in_specs=[x_spec, w_spec,
                  pl.BlockSpec((1, COUT_PAD), lambda b, t: (0, 0)),
                  pl.BlockSpec((1, COUT_PAD), lambda b, t: (0, 0))],
        out_specs=pl.BlockSpec((tile_rows, COUT_PAD),
                               lambda b, t: (b * n_row_tiles + t, 0)),
        out_shape=jax.ShapeDtypeStruct((m_total, COUT_PAD), jnp.bfloat16),
        compiler_params=pltpu.CompilerParams(
            dimension_semantics=("parallel", "parallel"),
            vmem_limit_bytes=32 * 1024 * 1024),
        cost_estimate=pl.CostEstimate(
            flops=conv_flops, transcendentals=0,
            bytes_accessed=x_bytes + w_bytes + m_total * COUT_PAD * 2),
    )(xkw, w_f, scale, shift)

    out = out.reshape(n, h_out, w_out, COUT_PAD)[..., :cout].astype(jnp.float32)
    return jnp.transpose(out, (0, 3, 1, 2))   # back to NCHW


if __name__ == "__main__":
    key = jax.random.PRNGKey(0)
    k_x, k_w, k_g, k_b = jax.random.split(key, 4)

    N, Cin, H, W = 2, 4, 16, 16
    Cout, KH, KW = 8, 3, 3

    x = jax.random.normal(k_x, (N, Cin, H, W), dtype=jnp.float32)
    w = jax.random.normal(k_w, (Cout, Cin, KH, KW), dtype=jnp.float32) * 0.1
    gamma = 1.0 + 0.1 * jax.random.normal(k_g, (Cout,), dtype=jnp.float32)
    beta = 0.1 * jax.random.normal(k_b, (Cout,), dtype=jnp.float32)

    out = conv_bn_relu(x, w, gamma, beta, stride=1, pad=1)
    out = jax.block_until_ready(out)

    # Reference: PyTorch module semantics (conv, train-mode BN with biased batch stats,
    # LeakyReLU). Conv operands rounded to bf16 to match the kernel's bf16 MXU inputs
    # (f32 accumulation on both sides); final result rounded through bf16 since the
    # kernel stores bf16.
    xq = x.astype(jnp.bfloat16).astype(jnp.float32)
    wq = w.astype(jnp.bfloat16).astype(jnp.float32)
    conv_ref = jax.lax.conv_general_dilated(
        xq, wq, window_strides=(1, 1), padding=((1, 1), (1, 1)),
        dimension_numbers=("NCHW", "OIHW", "NCHW"))
    mean = conv_ref.mean(axis=(0, 2, 3), keepdims=True)
    var = conv_ref.var(axis=(0, 2, 3), keepdims=True)          # biased, like BN train mode
    y_ref = (conv_ref - mean) * jax.lax.rsqrt(var + BN_EPS) \
        * gamma.reshape(1, -1, 1, 1) + beta.reshape(1, -1, 1, 1)
    ref = jnp.where(y_ref >= 0, y_ref, NEG_SLOPE * y_ref)
    ref = ref.astype(jnp.bfloat16).astype(jnp.float32)

    assert out.shape == (N, Cout, H, W)
    assert jnp.allclose(out, ref, atol=2e-2, rtol=2e-2), \
        float(jnp.max(jnp.abs(out - ref)))
    print("KERNEL_OK")
</pallas_src>

<mosaic_0001>
module attributes {stable_mosaic.version = 11 : i64} {
  func.func @_stats_kernel(%arg0: i32, %arg1: i32, %arg2: memref<1x18x16x12xbf16, #tpu.memory_space<vmem>>, %arg3: memref<3x12x128xbf16, #tpu.memory_space<vmem>>, %arg4: memref<1x8x128xf32, #tpu.memory_space<vmem>>) attributes {dimension_semantics = [#tpu.dimension_semantics<parallel>, #tpu.dimension_semantics<parallel>], iteration_bounds = array<i64: 2, 1>, scalar_prefetch = 0 : i64, scratch_operands = 0 : i64, tpu.core_type = #tpu.core_type<tc>, window_params = [{transform_indices = @transform_0, window_bounds = array<i64: 1, 18, 16, 12>}, {pipeline_mode = #tpu.pipeline_mode<synchronous>, transform_indices = @transform_1, window_bounds = array<i64: 3, 12, 128>}, {transform_indices = @transform_2, window_bounds = array<i64: 1, 8, 128>}]} {
    %c16_i32 = arith.constant 16 : i32
    %0 = arith.muli %arg1, %c16_i32 : i32
    %1 = tpu.assume_multiple %0, 16 : i32
    %c0_i32 = arith.constant 0 : i32
    %2 = arith.addi %1, %c0_i32 : i32
    %c0 = arith.constant 0 : index
    %3 = arith.index_cast %2 : i32 to index
    %c0_0 = arith.constant 0 : index
    %c0_1 = arith.constant 0 : index
    %4 = vector.load %arg2[%c0, %3, %c0_0, %c0_1] : memref<1x18x16x12xbf16, #tpu.memory_space<vmem>>, vector<1x16x16x12xbf16>
    %5 = vector.shape_cast %4 : vector<1x16x16x12xbf16> to vector<16x16x12xbf16>
    %6 = vector.shape_cast %5 : vector<16x16x12xbf16> to vector<256x12xbf16>
    %c0_2 = arith.constant 0 : index
    %c0_3 = arith.constant 0 : index
    %c0_4 = arith.constant 0 : index
    %7 = vector.load %arg3[%c0_2, %c0_3, %c0_4] : memref<3x12x128xbf16, #tpu.memory_space<vmem>>, vector<1x12x128xbf16>
    %8 = vector.shape_cast %7 : vector<1x12x128xbf16> to vector<12x128xbf16>
    %cst = arith.constant dense<0.000000e+00> : vector<256x128xf32>
    %9 = tpu.matmul %6, %8, %cst {dimension_numbers = #tpu.dot_dimension_numbers<[1], [0], [0], [1], [0, 0, 1, 1], [], []>} : vector<256x12xbf16>, vector<12x128xbf16>, vector<256x128xf32> -> vector<256x128xf32>
    %c1_i32 = arith.constant 1 : i32
    %10 = arith.addi %1, %c1_i32 : i32
    %c0_5 = arith.constant 0 : index
    %11 = arith.index_cast %10 : i32 to index
    %c0_6 = arith.constant 0 : index
    %c0_7 = arith.constant 0 : index
    %12 = vector.load %arg2[%c0_5, %11, %c0_6, %c0_7] : memref<1x18x16x12xbf16, #tpu.memory_space<vmem>>, vector<1x16x16x12xbf16>
    %13 = vector.shape_cast %12 : vector<1x16x16x12xbf16> to vector<16x16x12xbf16>
    %14 = vector.shape_cast %13 : vector<16x16x12xbf16> to vector<256x12xbf16>
    %c1 = arith.constant 1 : index
    %c0_8 = arith.constant 0 : index
    %c0_9 = arith.constant 0 : index
    %15 = vector.load %arg3[%c1, %c0_8, %c0_9] : memref<3x12x128xbf16, #tpu.memory_space<vmem>>, vector<1x12x128xbf16>
    %16 = vector.shape_cast %15 : vector<1x12x128xbf16> to vector<12x128xbf16>
    %cst_10 = arith.constant dense<0.000000e+00> : vector<256x128xf32>
    %17 = tpu.matmul %14, %16, %cst_10 {dimension_numbers = #tpu.dot_dimension_numbers<[1], [0], [0], [1], [0, 0, 1, 1], [], []>} : vector<256x12xbf16>, vector<12x128xbf16>, vector<256x128xf32> -> vector<256x128xf32>
    %18 = arith.addf %9, %17 : vector<256x128xf32>
    %c2_i32 = arith.constant 2 : i32
    %19 = arith.addi %1, %c2_i32 : i32
    %c0_11 = arith.constant 0 : index
    %20 = arith.index_cast %19 : i32 to index
    %c0_12 = arith.constant 0 : index
    %c0_13 = arith.constant 0 : index
    %21 = vector.load %arg2[%c0_11, %20, %c0_12, %c0_13] : memref<1x18x16x12xbf16, #tpu.memory_space<vmem>>, vector<1x16x16x12xbf16>
    %22 = vector.shape_cast %21 : vector<1x16x16x12xbf16> to vector<16x16x12xbf16>
    %23 = vector.shape_cast %22 : vector<16x16x12xbf16> to vector<256x12xbf16>
    %c2 = arith.constant 2 : index
    %c0_14 = arith.constant 0 : index
    %c0_15 = arith.constant 0 : index
    %24 = vector.load %arg3[%c2, %c0_14, %c0_15] : memref<3x12x128xbf16, #tpu.memory_space<vmem>>, vector<1x12x128xbf16>
    %25 = vector.shape_cast %24 : vector<1x12x128xbf16> to vector<12x128xbf16>
    %cst_16 = arith.constant dense<0.000000e+00> : vector<256x128xf32>
    %26 = tpu.matmul %23, %25, %cst_16 {dimension_numbers = #tpu.dot_dimension_numbers<[1], [0], [0], [1], [0, 0, 1, 1], [], []>} : vector<256x12xbf16>, vector<12x128xbf16>, vector<256x128xf32> -> vector<256x128xf32>
    %27 = arith.addf %18, %26 : vector<256x128xf32>
    %cst_17 = arith.constant 0.000000e+00 : f32
    %28 = vector.broadcast %cst_17 : f32 to vector<8x128xf32>
    %c0_18 = arith.constant 0 : index
    %c0_19 = arith.constant 0 : index
    %c0_20 = arith.constant 0 : index
    %29 = vector.load %arg4[%c0_18, %c0_19, %c0_20] : memref<1x8x128xf32, #tpu.memory_space<vmem>>, vector<1x8x128xf32>
    %30 = vector.shape_cast %29 : vector<1x8x128xf32> to vector<8x128xf32>
    %31 = vector.shape_cast %28 : vector<8x128xf32> to vector<1x8x128xf32>
    tpu.vector_store %arg4[%c0_18, %c0_19, %c0_20], %31 {strides = array<i32>} : memref<1x8x128xf32, #tpu.memory_space<vmem>>, vector<1x8x128xf32>,
    %cst_21 = arith.constant dense<0.000000e+00> : vector<128xf32>
    %32 = vector.multi_reduction <add>, %27, %cst_21 [0] : vector<256x128xf32> to vector<128xf32>
    %33 = vector.shape_cast %32 : vector<128xf32> to vector<1x128xf32>
    %c0_22 = arith.constant 0 : index
    %c0_23 = arith.constant 0 : index
    %c0_24 = arith.constant 0 : index
    %34 = vector.load %arg4[%c0_22, %c0_23, %c0_24] : memref<1x8x128xf32, #tpu.memory_space<vmem>>, vector<1x1x128xf32>
    %35 = vector.shape_cast %34 : vector<1x1x128xf32> to vector<1x128xf32>
    %36 = vector.shape_cast %33 : vector<1x128xf32> to vector<1x1x128xf32>
    tpu.vector_store %arg4[%c0_22, %c0_23, %c0_24], %36 {strides = array<i32>} : memref<1x8x128xf32, #tpu.memory_space<vmem>>, vector<1x1x128xf32>,
    %37 = arith.mulf %27, %27 : vector<256x128xf32>
    %cst_25 = arith.constant dense<0.000000e+00> : vector<128xf32>
    %38 = vector.multi_reduction <add>, %37, %cst_25 [0] : vector<256x128xf32> to vector<128xf32>
    %39 = vector.shape_cast %38 : vector<128xf32> to vector<1x128xf32>
    %c0_26 = arith.constant 0 : index
    %c1_27 = arith.constant 1 : index
    %c0_28 = arith.constant 0 : index
    %40 = vector.load %arg4[%c0_26, %c1_27, %c0_28] : memref<1x8x128xf32, #tpu.memory_space<vmem>>, vector<1x1x128xf32>
    %41 = vector.shape_cast %40 : vector<1x1x128xf32> to vector<1x128xf32>
    %42 = vector.shape_cast %39 : vector<1x128xf32> to vector<1x1x128xf32>
    tpu.vector_store %arg4[%c0_26, %c1_27, %c0_28], %42 {strides = array<i32>} : memref<1x8x128xf32, #tpu.memory_space<vmem>>, vector<1x1x128xf32>,
    return
  }
  func.func @transform_0(%arg0: i32, %arg1: i32) -> (i32, i32, i32, i32) {
    %c0_i32 = arith.constant 0 : i32
    %c0_i32_0 = arith.constant 0 : i32
    %c0_i32_1 = arith.constant 0 : i32
    %c0_i32_2 = arith.constant 0 : i32
    return %arg0, %c0_i32, %c0_i32_0, %c0_i32_1 : i32, i32, i32, i32
  }
  func.func @transform_1(%arg0: i32, %arg1: i32) -> (i32, i32, i32) {
    %c0_i32 = arith.constant 0 : i32
    %c0_i32_0 = arith.constant 0 : i32
    %c0_i32_1 = arith.constant 0 : i32
    %c0_i32_2 = arith.constant 0 : i32
    return %c0_i32, %c0_i32_0, %c0_i32_1 : i32, i32, i32
  }
  func.func @transform_2(%arg0: i32, %arg1: i32) -> (i32, i32, i32) {
    %c1_i32 = arith.constant 1 : i32
    %0 = arith.muli %arg0, %c1_i32 : i32
    %1 = arith.addi %0, %arg1 : i32
    %c0_i32 = arith.constant 0 : i32
    %c0_i32_0 = arith.constant 0 : i32
    %c0_i32_1 = arith.constant 0 : i32
    return %1, %c0_i32, %c0_i32_0 : i32, i32, i32
  }
}

</mosaic_0001>

<llo_original>
// kernel: tpu_custom_call.1
$region0: #{tpu_custom_call.1}
  #allocation0 [shape = 'u32[]', space=smem, size = 0x4, offset = 0x4, fixed_abs, tag = 'smem constant byte address 0x4 - core index']
  #allocation1 [shape = 'u32[144,128]{1,0:T(1,128)}', space=vmem, size = 0x12000, scoped, tag = 'internal scratch']
  %s0 = inlined_call_operand.vmem [shape: bf16[2,18,16,12], index: 0, kind: input, shape index: {}]
  %s1 = inlined_call_operand.vmem [shape: bf16[3,12,128], index: 1, kind: input, shape index: {}]
  %s2 = inlined_call_operand.hbm [shape: f32[2,8,128], index: 2, kind: output, shape index: {}]
  %s3 = sld [smem:[#allocation0]]
  $region41: #{tpu_custom_call.1} parent=0
    _
  %s5 = ssub.s32 1, %s3
  %s6 = scalar_select 0, %s5, %s3
  $region1: #{tpu_custom_call.1} parent=0
    #allocation2 [shape = 'u8[8192]{0}', space=vmem, size = 0x2000, scoped, tag = 'output window, operand 0']
    #allocation3 [shape = 's32[2]{0}', space=sflag, size = 0x8, scoped, tag = 'scoped memory for tpu_custom_call.1']
    %7 = vsyncpa [#allocation3], 0
    %s8 = scalar_lea.sflag [#allocation3], 1
    %9 = vsyncpa %s8, 0
    loop: start=0, step=1, limit=4
    $region2: #{tpu_custom_call.1} parent=1 // loop_pre_header
      _
    $region3: #{tpu_custom_call.1} parent=1 // loop_header
      %s11 = sphi 0, %s15
      %p12 = scmp.ge.s32.totalorder %s11, 4
      %s18 = sphi 0, %s30
      %s19 = sphi 0, %s26
      %s20 = sphi 0, %s18
      %s21 = sphi 0, %s19
      %s22 = sphi 0, %s20
      %s23 = sphi 0, %s21
      %s33 = sphi 0, %s35
      %s36 = sphi 0, %s33
      %s37 = sphi 0, %s36
      %s53 = sphi 0, %s37
      %s57 = sphi 0, %s57
      %s59 = sphi 0, %s57
      %s60 = sphi 0, %s59
      %s74 = sphi 0, %s60
      %s82 = sphi 0, %s84
      %s85 = sphi 0, %s82
      %s86 = sphi 0, %s85
      %s102 = sphi 0, %s86
    $region4: #{tpu_custom_call.1} parent=1 // loop_header_branch
      %14 = sbr.rel (%p12) target = $region8
    $region5: #{tpu_custom_call.1} parent=1 // loop_body
      %s16 = ssub.s32 %s11, 1
      %s17 = ssub.s32 %s11, 2
      %s24 = sadd.s32 1, %s19
      %p25 = scmp.ge.s32.totalorder %s24, 1
      %s26 = scalar_select %p25, 0, %s24
      %s27 = sadd.s32 1, %s18
      %s28 = scalar_select %p25, %s27, %s18
      %p29 = scmp.ge.s32.totalorder %s28, 2
      %s30 = scalar_select %p29, 0, %s28
      %s31 = ssub.s32 %s18, %s30
      %p32 = scmp.eq.s32.totalorder %s31, 0
      %s34 = sadd.s32 %s33, 1
      %s35 = scalar_select %p32, %s33, %s34
      %p38 = pneg %p32
      %p39 = scmp.eq.s32.totalorder %s11, 1
      %p40 = por %p38, %p39
      %p41 = scmp.ne.s32.totalorder %s33, %s36
      %p42 = scmp.eq.s32.totalorder %s11, 0
      %p43 = por %p41, %p42
      %p44 = scmp.ne.s32.totalorder %s33, %s36
      %p45 = scmp.eq.s32.totalorder %s16, 1
      %p46 = por %p44, %p45
      %p47 = scmp.ne.s32.totalorder %s36, %s37
      %p48 = scmp.eq.s32.totalorder %s16, 0
      %p49 = por %p47, %p48
      %p50 = scmp.ne.s32.totalorder %s36, %s37
      %p51 = scmp.eq.s32.totalorder %s17, 1
      %p52 = por %p50, %p51
      %p54 = scmp.ne.s32.totalorder %s37, %s53
      %p55 = scmp.eq.s32.totalorder %s17, 0
      %p56 = por %p54, %p55
      %s58 = sadd.s32 %s57, 1
      %p61 = scmp.eq.s32.totalorder %s11, 1
      %p62 = scmp.ne.s32.totalorder %s57, %s59
      %p63 = scmp.eq.s32.totalorder %s11, 0
      %p64 = por %p62, %p63
      %p65 = scmp.ne.s32.totalorder %s57, %s59
      %p66 = scmp.eq.s32.totalorder %s16, 1
      %p67 = por %p65, %p66
      %p68 = scmp.ne.s32.totalorder %s59, %s60
      %p69 = scmp.eq.s32.totalorder %s16, 0
      %p70 = por %p68, %p69
      %p71 = scmp.ne.s32.totalorder %s59, %s60
      %p72 = scmp.eq.s32.totalorder %s17, 1
      %p73 = por %p71, %p72
      %p75 = scmp.ne.s32.totalorder %s60, %s74
      %p76 = scmp.eq.s32.totalorder %s17, 0
      %p77 = por %p75, %p76
      %s78 = sadd.s32 %s18, %s19
      %s79 = sadd.s32 %s30, %s26
      %s80 = ssub.s32 %s78, %s79
      %p81 = scmp.eq.s32.totalorder %s80, 0
      %s83 = sadd.s32 %s82, 1
      %s84 = scalar_select %p81, %s82, %s83
      %p87 = pneg %p81
      %p88 = scmp.eq.s32.totalorder %s11, 1
      %p89 = por %p87, %p88
      %p90 = scmp.ne.s32.totalorder %s82, %s85
      %p91 = scmp.eq.s32.totalorder %s11, 0
      %p92 = por %p90, %p91
      %p93 = scmp.ne.s32.totalorder %s82, %s85
      %p94 = scmp.eq.s32.totalorder %s16, 1
      %p95 = por %p93, %p94
      %p96 = scmp.ne.s32.totalorder %s85, %s86
      %p97 = scmp.eq.s32.totalorder %s16, 0
      %p98 = por %p96, %p97
      %p99 = scmp.ne.s32.totalorder %s85, %s86
      %p100 = scmp.eq.s32.totalorder %s17, 1
      %p101 = por %p99, %p100
      %p103 = scmp.ne.s32.totalorder %s86, %s102
      %p104 = scmp.eq.s32.totalorder %s17, 0
      %p105 = por %p103, %p104
      %p106 = scmp.le.s32.totalorder 1, %s11
      %p107 = scmp.lt.s32.totalorder %s11, 3
      %p108 = pnand %p106, %p107
      %p109 = pneg %p108
      // Predicated region
      $region9: #{tpu_custom_call.1} parent=5 // pred_check
        _
      $region10: #{tpu_custom_call.1} parent=5 // pred_check_branch
        %111 = sbr.rel (%p108) target = $region12
      $region11: #{tpu_custom_call.1} parent=5 // pred_region
        %s112 = ssub.s32 %s11, 1
        // Predicated region
        $region13: #{tpu_custom_call.1} parent=11 // pred_check
          %p113 = pneg %p70
        $region14: #{tpu_custom_call.1} parent=11 // pred_check_branch
          %115 = sbr.rel (%p113) target = $region16
        $region15: #{tpu_custom_call.1} parent=11 // pred_region
          _
        $region16: #{tpu_custom_call.1} parent=11 // pred_fallthru
          _
      $region12: #{tpu_custom_call.1} parent=5 // pred_fallthru
        _
      %p116 = scmp.lt.s32.totalorder %s11, 2
      // Predicated region
      $region17: #{tpu_custom_call.1} parent=5 // pred_check
        %p117 = pneg %p116
      $region18: #{tpu_custom_call.1} parent=5 // pred_check_branch
        %119 = sbr.rel (%p117) target = $region20
      $region19: #{tpu_custom_call.1} parent=5 // pred_region
        // Predicated region
        $region21: #{tpu_custom_call.1} parent=19 // pred_check
          %p120 = pneg %p43
        $region22: #{tpu_custom_call.1} parent=19 // pred_check_branch
          %122 = sbr.rel (%p120) target = $region24
        $region23: #{tpu_custom_call.1} parent=19 // pred_region
          %p123 = scmp.lt.s32.totalorder %s18, 1
          %s124 = scalar_select %p123, %s18, 1
          %s125 = smul.addr %s124, 36
          %s126 = smul.addr %s125, 4
          %s127 = scalar_lea.vmem %s0, %s126
        $region24: #{tpu_custom_call.1} parent=19 // pred_fallthru
          _
      $region20: #{tpu_custom_call.1} parent=5 // pred_fallthru
        _
      %p128 = scmp.le.s32.totalorder 1, %s11
      %p129 = scmp.lt.s32.totalorder %s11, 3
      %p130 = pnand %p128, %p129
      %p131 = pneg %p130
      // Predicated region
      $region25: #{tpu_custom_call.1} parent=5 // pred_check
        _
      $region26: #{tpu_custom_call.1} parent=5 // pred_check_branch
        %133 = sbr.rel (%p130) target = $region28
      $region27: #{tpu_custom_call.1} parent=5 // pred_region
        %s134 = ssub.s32 %s11, 1
        %p135 = scmp.lt.s32.totalorder %s20, 1
        %s136 = scalar_select %p135, %s20, 1
        %s137 = smul.addr %s136, 36
        %s138 = smul.addr %s137, 4
        %s139 = scalar_lea.vmem %s0, %s138
        %p140 = pneg %p49
        %p141 = pneg %p46
        %p142 = pneg %p70
        %p143 = pneg %p67
        %p144 = pneg %p98
        %p145 = pneg %p95
        %s146 = sand.u32 %s85, 1
        %s147 = scalar_lea.sflag [#allocation3], %s146
        %s148 = sand.u32 %s85, 1
        %s149 = smul.addr %s148, 8
        %s150 = scalar_lea.vmem [#allocation2], %s149
        %p151 = scmp.lt.s32.totalorder %s20, 1
        %s152 = scalar_select %p151, %s20, 1
        %s153 = smul.addr %s152, 36
        %s154 = smul.addr %s153, 4
        %s155 = scalar_lea.vmem %s0, %s154
        %s156 = sadd.s32 %s20, %s21
        %s158 = smul.u32 %s21, 16
        %s159 = smul.u32 %s158, 2
        %s160 = smul.addr %s159, 4
        %s161 = scalar_lea.vmem %s155, %s160
        %v162 = vld [vmem:[%s161] sm:$0xf]
        %v163 = vld [vmem:[%s161 + $0x4] sm:$0xf]
        %v164 = vld [vmem:[%s161 + $0x8] sm:$0xf]
        %v165 = vld [vmem:[%s161 + $0xc] sm:$0xf]
        %v166 = vld [vmem:[%s161 + $0x10] sm:$0xf]
        %v167 = vld [vmem:[%s161 + $0x14] sm:$0xf]
        %v168 = vld [vmem:[%s161 + $0x18] sm:$0xf]
        %v169 = vld [vmem:[%s161 + $0x1c] sm:$0xf]
        %v170 = vld [vmem:[%s161 + $0x20] sm:$0xf]
        %v171 = vld [vmem:[%s161 + $0x24] sm:$0xf]
        %v172 = vld [vmem:[%s161 + $0x28] sm:$0xf]
        %v173 = vld [vmem:[%s161 + $0x2c] sm:$0xf]
        %v174 = vld [vmem:[%s161 + $0x30] sm:$0xf]
        %v175 = vld [vmem:[%s161 + $0x34] sm:$0xf]
        %v176 = vld [vmem:[%s161 + $0x38] sm:$0xf]
        %v177 = vld [vmem:[%s161 + $0x3c] sm:$0xf]
        %v178 = vld [vmem:[%s161 + $0x40] sm:$0xf]
        %v179 = vld [vmem:[%s161 + $0x44] sm:$0xf]
        %v180 = vld [vmem:[%s161 + $0x48] sm:$0xf]
        %v181 = vld [vmem:[%s161 + $0x4c] sm:$0xf]
        %v182 = vld [vmem:[%s161 + $0x50] sm:$0xf]
        %v183 = vld [vmem:[%s161 + $0x54] sm:$0xf]
        %v184 = vld [vmem:[%s161 + $0x58] sm:$0xf]
        %v185 = vld [vmem:[%s161 + $0x5c] sm:$0xf]
        %v186 = vld [vmem:[%s161 + $0x60] sm:$0xf]
        %v187 = vld [vmem:[%s161 + $0x64] sm:$0xf]
        %v188 = vld [vmem:[%s161 + $0x68] sm:$0xf]
        %v189 = vld [vmem:[%s161 + $0x6c] sm:$0xf]
        %v190 = vld [vmem:[%s161 + $0x70] sm:$0xf]
        %v191 = vld [vmem:[%s161 + $0x74] sm:$0xf]
        %v192 = vld [vmem:[%s161 + $0x78] sm:$0xf]
        %v193 = vld [vmem:[%s161 + $0x7c] sm:$0xf]
        %v194 = vld [vmem:[%s1] sm:$0xf]
        %v195 = vld [vmem:[%s1 + $0x4] sm:$0x3]
        %s196 = sadd.s32 %s158, 1
        %s197 = smul.u32 %s196, 2
        %s198 = smul.addr %s197, 4
        %s199 = scalar_lea.vmem %s155, %s198
        %v200 = vld [vmem:[%s199] sm:$0xf]
        %v201 = vld [vmem:[%s199 + $0x4] sm:$0xf]
        %v202 = vld [vmem:[%s199 + $0x8] sm:$0xf]
        %v203 = vld [vmem:[%s199 + $0xc] sm:$0xf]
        %v204 = vld [vmem:[%s199 + $0x10] sm:$0xf]
        %v205 = vld [vmem:[%s199 + $0x14] sm:$0xf]
        %v206 = vld [vmem:[%s199 + $0x18] sm:$0xf]
        %v207 = vld [vmem:[%s199 + $0x1c] sm:$0xf]
        %v208 = vld [vmem:[%s199 + $0x20] sm:$0xf]
        %v209 = vld [vmem:[%s199 + $0x24] sm:$0xf]
        %v210 = vld [vmem:[%s199 + $0x28] sm:$0xf]
        %v211 = vld [vmem:[%s199 + $0x2c] sm:$0xf]
        %v212 = vld [vmem:[%s199 + $0x30] sm:$0xf]
        %v213 = vld [vmem:[%s199 + $0x34] sm:$0xf]
        %v214 = vld [vmem:[%s199 + $0x38] sm:$0xf]
        %v215 = vld [vmem:[%s199 + $0x3c] sm:$0xf]
        %v216 = vld [vmem:[%s199 + $0x40] sm:$0xf]
        %v217 = vld [vmem:[%s199 + $0x44] sm:$0xf]
        %v218 = vld [vmem:[%s199 + $0x48] sm:$0xf]
        %v219 = vld [vmem:[%s199 + $0x4c] sm:$0xf]
        %v220 = vld [vmem:[%s199 + $0x50] sm:$0xf]
        %v221 = vld [vmem:[%s199 + $0x54] sm:$0xf]
        %v222 = vld [vmem:[%s199 + $0x58] sm:$0xf]
        %v223 = vld [vmem:[%s199 + $0x5c] sm:$0xf]
        %v224 = vld [vmem:[%s199 + $0x60] sm:$0xf]
        %v225 = vld [vmem:[%s199 + $0x64] sm:$0xf]
        %v226 = vld [vmem:[%s199 + $0x68] sm:$0xf]
        %v227 = vld [vmem:[%s199 + $0x6c] sm:$0xf]
        %v228 = vld [vmem:[%s199 + $0x70] sm:$0xf]
        %v229 = vld [vmem:[%s199 + $0x74] sm:$0xf]
        %v230 = vld [vmem:[%s199 + $0x78] sm:$0xf]
        %v231 = vld [vmem:[%s199 + $0x7c] sm:$0xf]
        %s232 = scalar_lea.vmem %s1, 8
        %v233 = vld [vmem:[%s232] sm:$0xf]
        %v234 = vld [vmem:[%s232 + $0x4] sm:$0x3]
        %v267 = vunpack.c.l.b16 %v200
        %v268 = vunpack.c.l.b16 %v201
        %v269 = vunpack.c.l.b16 %v202
        %v270 = vunpack.c.l.b16 %v203
        %v271 = vunpack.c.l.b16 %v204
        %v272 = vunpack.c.l.b16 %v205
        %v273 = vunpack.c.l.b16 %v206
        %v274 = vunpack.c.l.b16 %v207
        %v275 = vunpack.c.l.b16 %v208
        %v276 = vunpack.c.l.b16 %v209
        %v277 = vunpack.c.l.b16 %v210
        %v278 = vunpack.c.l.b16 %v211
        %v279 = vunpack.c.l.b16 %v212
        %v280 = vunpack.c.l.b16 %v213
        %v281 = vunpack.c.l.b16 %v214
        %v282 = vunpack.c.l.b16 %v215
        %v283 = vunpack.c.l.b16 %v216
        %v284 = vunpack.c.l.b16 %v217
        %v285 = vunpack.c.l.b16 %v218
        %v286 = vunpack.c.l.b16 %v219
        %v287 = vunpack.c.l.b16 %v220
        %v288 = vunpack.c.l.b16 %v221
        %v289 = vunpack.c.l.b16 %v222
        %v290 = vunpack.c.l.b16 %v223
        %v291 = vunpack.c.l.b16 %v224
        %v292 = vunpack.c.l.b16 %v225
        %v293 = vunpack.c.l.b16 %v226
        %v294 = vunpack.c.l.b16 %v227
        %v295 = vunpack.c.l.b16 %v228
        %v296 = vunpack.c.l.b16 %v229
        %v297 = vunpack.c.l.b16 %v230
        %v298 = vunpack.c.l.b16 %v231
        %v299 = vpack.c.b16 %v268, %v267
        %v300 = vpack.c.b16 %v270, %v269
        %v301 = vpack.c.b16 %v272, %v271
        %v302 = vpack.c.b16 %v274, %v273
        %v303 = vpack.c.b16 %v276, %v275
        %v304 = vpack.c.b16 %v278, %v277
        %v305 = vpack.c.b16 %v280, %v279
        %v306 = vpack.c.b16 %v282, %v281
        %v307 = vpack.c.b16 %v284, %v283
        %v308 = vpack.c.b16 %v286, %v285
        %v309 = vpack.c.b16 %v288, %v287
        %v310 = vpack.c.b16 %v290, %v289
        %v311 = vpack.c.b16 %v292, %v291
        %v312 = vpack.c.b16 %v294, %v293
        %v313 = vpack.c.b16 %v296, %v295
        %v314 = vpack.c.b16 %v298, %v297
        %v317 = vunpack.c.l.b16 %v233
        %v318 = vunpack.c.l.b16 %v234
        %v319 = vpack.c.b16 %v318, %v317
        %vm320 = vcmask 97280
        %v322 = vsel %vm320, %v299, 0
        %v325 = vsel %vm320, %v300, 0
        %v328 = vsel %vm320, %v301, 0
        %v331 = vsel %vm320, %v302, 0
        %v334 = vsel %vm320, %v303, 0
        %v337 = vsel %vm320, %v304, 0
        %v340 = vsel %vm320, %v305, 0
        %v343 = vsel %vm320, %v306, 0
        %v346 = vsel %vm320, %v307, 0
        %v349 = vsel %vm320, %v308, 0
        %v352 = vsel %vm320, %v309, 0
        %v355 = vsel %vm320, %v310, 0
        %v358 = vsel %vm320, %v311, 0
        %v361 = vsel %vm320, %v312, 0
        %v364 = vsel %vm320, %v313, 0
        %v367 = vsel %vm320, %v314, 0
        %vm369 = vcmask 1045504
        %v371 = vsel %vm369, %v319, 0
        %373 = vmatprep.subr.bf16.mxu0 0
        %374 = vmatpush1.bf16.msra.mxu0 %v371
        %375 = vmatprep.subr.bf16.mxu0 0
        %376 = vmatpush1.bf16.msra.mxu0 0
        %377 = vmatprep.subr.bf16.mxu0 0
        %378 = vmatpush1.bf16.msra.mxu0 0
        %379 = vmatprep.subr.bf16.mxu0 0
        %380 = vmatpush1.bf16.msra.mxu0 0
        %381 = vmatprep.subr.bf16.mxu0 0
        %382 = vmatpush1.bf16.msra.mxu0 0
        %383 = vmatprep.subr.bf16.mxu0 0
        %384 = vmatpush1.bf16.msra.mxu0 0
        %385 = vmatprep.subr.bf16.mxu0 0
        %386 = vmatpush1.bf16.msra.mxu0 0
        %387 = vmatprep.subr.bf16.mxu0 0
        %388 = vmatpush1.bf16.msra.mxu0 0
        %389 = vmatprep.subr.bf16.mxu0 0
        %390 = vmatpush1.bf16.msra.mxu0 0
        %391 = vmatprep.subr.bf16.mxu0 0
        %392 = vmatpush1.bf16.msra.mxu0 0
        %393 = vmatprep.subr.bf16.mxu0 0
        %394 = vmatpush1.bf16.msra.mxu0 0
        %395 = vmatprep.subr.bf16.mxu0 0
        %396 = vmatpush1.bf16.msra.mxu0 0
        %397 = vmatprep.subr.bf16.mxu0 0
        %398 = vmatpush1.bf16.msra.mxu0 0
        %399 = vmatprep.subr.bf16.mxu0 0
        %400 = vmatpush1.bf16.msra.mxu0 0
        %401 = vmatprep.subr.bf16.mxu0 0
        %402 = vmatpush1.bf16.msra.mxu0 0
        %403 = vmatprep.subr.bf16.mxu0 0
        %404 = vmatpush1.bf16.msra.mxu0 0
        %405 = vmatprep.mubr.bf16.mxu0 0
        %406 = vmatmul.mubr.bf16.gmra.mrb[0].mxu0 %v322
        %v407 = vpop.f32.mrb[0].mxu0
        %v408 = vadd.f32 0.0, %v407
        %v409 = vpop.f32.mrb[0].mxu0
        %v410 = vpop.f32.mrb[0].mxu0
        %v411 = vadd.f32 0.0, %v410
        %v412 = vpop.f32.mrb[0].mxu0
        %413 = vmatprep.mubr.bf16.mxu0 0
        %414 = vmatmul.mubr.bf16.gmra.mrb[0].mxu0 %v325
        %v415 = vpop.f32.mrb[0].mxu0
        %v416 = vadd.f32 0.0, %v415
        %v417 = vpop.f32.mrb[0].mxu0
        %v418 = vpop.f32.mrb[0].mxu0
        %v419 = vadd.f32 0.0, %v418
        %v420 = vpop.f32.mrb[0].mxu0
        %421 = vmatprep.mubr.bf16.mxu0 0
        %422 = vmatmul.mubr.bf16.gmra.mrb[0].mxu0 %v328
        %v423 = vpop.f32.mrb[0].mxu0
        %v424 = vadd.f32 0.0, %v423
        %v425 = vpop.f32.mrb[0].mxu0
        %v426 = vpop.f32.mrb[0].mxu0
        %v427 = vadd.f32 0.0, %v426
        %v428 = vpop.f32.mrb[0].mxu0
        %429 = vmatprep.mubr.bf16.mxu0 0
        %430 = vmatmul.mubr.bf16.gmra.mrb[0].mxu0 %v331
        %v431 = vpop.f32.mrb[0].mxu0
        %v432 = vadd.f32 0.0, %v431
        %v433 = vpop.f32.mrb[0].mxu0
        %v434 = vpop.f32.mrb[0].mxu0
        %v435 = vadd.f32 0.0, %v434
        %v436 = vpop.f32.mrb[0].mxu0
        %437 = vmatprep.mubr.bf16.mxu0 0
        %438 = vmatmul.mubr.bf16.gmra.mrb[0].mxu0 %v334
        %v439 = vpop.f32.mrb[0].mxu0
        %v440 = vadd.f32 0.0, %v439
        %v441 = vpop.f32.mrb[0].mxu0
        %v442 = vpop.f32.mrb[0].mxu0
        %v443 = vadd.f32 0.0, %v442
        %v444 = vpop.f32.mrb[0].mxu0
        %445 = vmatprep.mubr.bf16.mxu0 0
        %446 = vmatmul.mubr.bf16.gmra.mrb[0].mxu0 %v337
        %v447 = vpop.f32.mrb[0].mxu0
        %v448 = vadd.f32 0.0, %v447
        %v449 = vpop.f32.mrb[0].mxu0
        %v450 = vpop.f32.mrb[0].mxu0
        %v451 = vadd.f32 0.0, %v450
        %v452 = vpop.f32.mrb[0].mxu0
        %453 = vmatprep.mubr.bf16.mxu0 0
        %454 = vmatmul.mubr.bf16.gmra.mrb[0].mxu0 %v340
        %v455 = vpop.f32.mrb[0].mxu0
        %v456 = vadd.f32 0.0, %v455
        %v457 = vpop.f32.mrb[0].mxu0
        %v458 = vpop.f32.mrb[0].mxu0
        %v459 = vadd.f32 0.0, %v458
        %v460 = vpop.f32.mrb[0].mxu0
        %461 = vmatprep.mubr.bf16.mxu0 0
        %462 = vmatmul.mubr.bf16.gmra.mrb[0].mxu0 %v343
        %v463 = vpop.f32.mrb[0].mxu0
        %v464 = vadd.f32 0.0, %v463
        %v465 = vpop.f32.mrb[0].mxu0
        %v466 = vpop.f32.mrb[0].mxu0
        %v467 = vadd.f32 0.0, %v466
        %v468 = vpop.f32.mrb[0].mxu0
        %469 = vmatprep.mubr.bf16.mxu0 0
        %470 = vmatmul.mubr.bf16.gmra.mrb[0].mxu0 %v346
        %v471 = vpop.f32.mrb[0].mxu0
        %v472 = vadd.f32 0.0, %v471
        %v473 = vpop.f32.mrb[0].mxu0
        %v474 = vpop.f32.mrb[0].mxu0
        %v475 = vadd.f32 0.0, %v474
        %v476 = vpop.f32.mrb[0].mxu0
        %477 = vmatprep.mubr.bf16.mxu0 0
        %478 = vmatmul.mubr.bf16.gmra.mrb[0].mxu0 %v349
        %v479 = vpop.f32.mrb[0].mxu0
        %v480 = vadd.f32 0.0, %v479
        %v481 = vpop.f32.mrb[0].mxu0
        %v482 = vpop.f32.mrb[0].mxu0
        %v483 = vadd.f32 0.0, %v482
        %v484 = vpop.f32.mrb[0].mxu0
        %485 = vmatprep.mubr.bf16.mxu0 0
        %486 = vmatmul.mubr.bf16.gmra.mrb[0].mxu0 %v352
        %v487 = vpop.f32.mrb[0].mxu0
        %v488 = vadd.f32 0.0, %v487
        %v489 = vpop.f32.mrb[0].mxu0
        %v490 = vpop.f32.mrb[0].mxu0
        %v491 = vadd.f32 0.0, %v490
        %v492 = vpop.f32.mrb[0].mxu0
        %493 = vmatprep.mubr.bf16.mxu0 0
        %494 = vmatmul.mubr.bf16.gmra.mrb[0].mxu0 %v355
        %v495 = vpop.f32.mrb[0].mxu0
        %v496 = vadd.f32 0.0, %v495
        %v497 = vpop.f32.mrb[0].mxu0
        %v498 = vpop.f32.mrb[0].mxu0
        %v499 = vadd.f32 0.0, %v498
        %v500 = vpop.f32.mrb[0].mxu0
        %501 = vmatprep.mubr.bf16.mxu0 0
        %502 = vmatmul.mubr.bf16.gmra.mrb[0].mxu0 %v358
        %v503 = vpop.f32.mrb[0].mxu0
        %v504 = vadd.f32 0.0, %v503
        %v505 = vpop.f32.mrb[0].mxu0
        %v506 = vpop.f32.mrb[0].mxu0
        %v507 = vadd.f32 0.0, %v506
        %v508 = vpop.f32.mrb[0].mxu0
        %509 = vmatprep.mubr.bf16.mxu0 0
        %510 = vmatmul.mubr.bf16.gmra.mrb[0].mxu0 %v361
        %v511 = vpop.f32.mrb[0].mxu0
        %v512 = vadd.f32 0.0, %v511
        %v513 = vpop.f32.mrb[0].mxu0
        %v514 = vpop.f32.mrb[0].mxu0
        %v515 = vadd.f32 0.0, %v514
        %v516 = vpop.f32.mrb[0].mxu0
        %517 = vmatprep.mubr.bf16.mxu0 0
        %518 = vmatmul.mubr.bf16.gmra.mrb[0].mxu0 %v364
        %v519 = vpop.f32.mrb[0].mxu0
        %v520 = vadd.f32 0.0, %v519
        %v521 = vpop.f32.mrb[0].mxu0
        %v522 = vpop.f32.mrb[0].mxu0
        %v523 = vadd.f32 0.0, %v522
        %v524 = vpop.f32.mrb[0].mxu0
        %525 = vmatprep.mubr.bf16.mxu0 0
        %526 = vmatmul.mubr.bf16.gmra.mrb[0].mxu0 %v367
        %v527 = vpop.f32.mrb[0].mxu0
        %v528 = vadd.f32 0.0, %v527
        %v529 = vpop.f32.mrb[0].mxu0
        %v530 = vpop.f32.mrb[0].mxu0
        %v531 = vadd.f32 0.0, %v530
        %v532 = vpop.f32.mrb[0].mxu0
        %533 = vdwg.mxu0
        %v566 = vunpack.c.l.b16 %v162
        %v567 = vunpack.c.l.b16 %v163
        %v568 = vunpack.c.l.b16 %v164
        %v569 = vunpack.c.l.b16 %v165
        %v570 = vunpack.c.l.b16 %v166
        %v571 = vunpack.c.l.b16 %v167
        %v572 = vunpack.c.l.b16 %v168
        %v573 = vunpack.c.l.b16 %v169
        %v574 = vunpack.c.l.b16 %v170
        %v575 = vunpack.c.l.b16 %v171
        %v576 = vunpack.c.l.b16 %v172
        %v577 = vunpack.c.l.b16 %v173
        %v578 = vunpack.c.l.b16 %v174
        %v579 = vunpack.c.l.b16 %v175
        %v580 = vunpack.c.l.b16 %v176
        %v581 = vunpack.c.l.b16 %v177
        %v582 = vunpack.c.l.b16 %v178
        %v583 = vunpack.c.l.b16 %v179
        %v584 = vunpack.c.l.b16 %v180
        %v585 = vunpack.c.l.b16 %v181
        %v586 = vunpack.c.l.b16 %v182
        %v587 = vunpack.c.l.b16 %v183
        %v588 = vunpack.c.l.b16 %v184
        %v589 = vunpack.c.l.b16 %v185
        %v590 = vunpack.c.l.b16 %v186
        %v591 = vunpack.c.l.b16 %v187
        %v592 = vunpack.c.l.b16 %v188
        %v593 = vunpack.c.l.b16 %v189
        %v594 = vunpack.c.l.b16 %v190
        %v595 = vunpack.c.l.b16 %v191
        %v596 = vunpack.c.l.b16 %v192
        %v597 = vunpack.c.l.b16 %v193
        %v598 = vpack.c.b16 %v567, %v566
        %v599 = vpack.c.b16 %v569, %v568
        %v600 = vpack.c.b16 %v571, %v570
        %v601 = vpack.c.b16 %v573, %v572
        %v602 = vpack.c.b16 %v575, %v574
        %v603 = vpack.c.b16 %v577, %v576
        %v604 = vpack.c.b16 %v579, %v578
        %v605 = vpack.c.b16 %v581, %v580
        %v606 = vpack.c.b16 %v583, %v582
        %v607 = vpack.c.b16 %v585, %v584
        %v608 = vpack.c.b16 %v587, %v586
        %v609 = vpack.c.b16 %v589, %v588
        %v610 = vpack.c.b16 %v591, %v590
        %v611 = vpack.c.b16 %v593, %v592
        %v612 = vpack.c.b16 %v595, %v594
        %v613 = vpack.c.b16 %v597, %v596
        %v616 = vunpack.c.l.b16 %v194
        %v617 = vunpack.c.l.b16 %v195
        %v618 = vpack.c.b16 %v617, %v616
        %v620 = vsel %vm320, %v598, 0
        %v623 = vsel %vm320, %v599, 0
        %v626 = vsel %vm320, %v600, 0
        %v629 = vsel %vm320, %v601, 0
        %v632 = vsel %vm320, %v602, 0
        %v635 = vsel %vm320, %v603, 0
        %v638 = vsel %vm320, %v604, 0
        %v641 = vsel %vm320, %v605, 0
        %v644 = vsel %vm320, %v606, 0
        %v647 = vsel %vm320, %v607, 0
        %v650 = vsel %vm320, %v608, 0
        %v653 = vsel %vm320, %v609, 0
        %v656 = vsel %vm320, %v610, 0
        %v659 = vsel %vm320, %v611, 0
        %v662 = vsel %vm320, %v612, 0
        %v665 = vsel %vm320, %v613, 0
        %v668 = vsel %vm369, %v618, 0
        %670 = vmatprep.subr.bf16.mxu0 0
        %671 = vmatpush1.bf16.msra.mxu0 %v668
        %672 = vmatprep.subr.bf16.mxu0 0
        %673 = vmatpush1.bf16.msra.mxu0 0
        %674 = vmatprep.subr.bf16.mxu0 0
        %675 = vmatpush1.bf16.msra.mxu0 0
        %676 = vmatprep.subr.bf16.mxu0 0
        %677 = vmatpush1.bf16.msra.mxu0 0
        %678 = vmatprep.subr.bf16.mxu0 0
        %679 = vmatpush1.bf16.msra.mxu0 0
        %680 = vmatprep.subr.bf16.mxu0 0
        %681 = vmatpush1.bf16.msra.mxu0 0
        %682 = vmatprep.subr.bf16.mxu0 0
        %683 = vmatpush1.bf16.msra.mxu0 0
        %684 = vmatprep.subr.bf16.mxu0 0
        %685 = vmatpush1.bf16.msra.mxu0 0
        %686 = vmatprep.subr.bf16.mxu0 0
        %687 = vmatpush1.bf16.msra.mxu0 0
        %688 = vmatprep.subr.bf16.mxu0 0
        %689 = vmatpush1.bf16.msra.mxu0 0
        %690 = vmatprep.subr.bf16.mxu0 0
        %691 = vmatpush1.bf16.msra.mxu0 0
        %692 = vmatprep.subr.bf16.mxu0 0
        %693 = vmatpush1.bf16.msra.mxu0 0
        %694 = vmatprep.subr.bf16.mxu0 0
        %695 = vmatpush1.bf16.msra.mxu0 0
        %696 = vmatprep.subr.bf16.mxu0 0
        %697 = vmatpush1.bf16.msra.mxu0 0
        %698 = vmatprep.subr.bf16.mxu0 0
        %699 = vmatpush1.bf16.msra.mxu0 0
        %700 = vmatprep.subr.bf16.mxu0 0
        %701 = vmatpush1.bf16.msra.mxu0 0
        %702 = vmatprep.mubr.bf16.mxu0 0
        %703 = vmatmul.mubr.bf16.gmra.mrb[0].mxu0 %v620
        %v704 = vpop.f32.mrb[0].mxu0
        %v705 = vadd.f32 %v408, %v704
        %v706 = vpop.f32.mrb[0].mxu0
        %v707 = vpop.f32.mrb[0].mxu0
        %v708 = vadd.f32 %v411, %v707
        %v709 = vpop.f32.mrb[0].mxu0
        %710 = vmatprep.mubr.bf16.mxu0 0
        %711 = vmatmul.mubr.bf16.gmra.mrb[0].mxu0 %v623
        %v712 = vpop.f32.mrb[0].mxu0
        %v713 = vadd.f32 %v416, %v712
        %v714 = vpop.f32.mrb[0].mxu0
        %v715 = vpop.f32.mrb[0].mxu0
        %v716 = vadd.f32 %v419, %v715
        %v717 = vpop.f32.mrb[0].mxu0
        %718 = vmatprep.mubr.bf16.mxu0 0
        %719 = vmatmul.mubr.bf16.gmra.mrb[0].mxu0 %v626
        %v720 = vpop.f32.mrb[0].mxu0
        %v721 = vadd.f32 %v424, %v720
        %v722 = vpop.f32.mrb[0].mxu0
        %v723 = vpop.f32.mrb[0].mxu0
        %v724 = vadd.f32 %v427, %v723
        %v725 = vpop.f32.mrb[0].mxu0
        %726 = vmatprep.mubr.bf16.mxu0 0
        %727 = vmatmul.mubr.bf16.gmra.mrb[0].mxu0 %v629
        %v728 = vpop.f32.mrb[0].mxu0
        %v729 = vadd.f32 %v432, %v728
        %v730 = vpop.f32.mrb[0].mxu0
        %v731 = vpop.f32.mrb[0].mxu0
        %v732 = vadd.f32 %v435, %v731
        %v733 = vpop.f32.mrb[0].mxu0
        %734 = vmatprep.mubr.bf16.mxu0 0
        %735 = vmatmul.mubr.bf16.gmra.mrb[0].mxu0 %v632
        %v736 = vpop.f32.mrb[0].mxu0
        %v737 = vadd.f32 %v440, %v736
        %v738 = vpop.f32.mrb[0].mxu0
        %v739 = vpop.f32.mrb[0].mxu0
        %v740 = vadd.f32 %v443, %v739
        %v741 = vpop.f32.mrb[0].mxu0
        %742 = vmatprep.mubr.bf16.mxu0 0
        %743 = vmatmul.mubr.bf16.gmra.mrb[0].mxu0 %v635
        %v744 = vpop.f32.mrb[0].mxu0
        %v745 = vadd.f32 %v448, %v744
        %v746 = vpop.f32.mrb[0].mxu0
        %v747 = vpop.f32.mrb[0].mxu0
        %v748 = vadd.f32 %v451, %v747
        %v749 = vpop.f32.mrb[0].mxu0
        %750 = vmatprep.mubr.bf16.mxu0 0
        %751 = vmatmul.mubr.bf16.gmra.mrb[0].mxu0 %v638
        %v752 = vpop.f32.mrb[0].mxu0
        %v753 = vadd.f32 %v456, %v752
        %v754 = vpop.f32.mrb[0].mxu0
        %v755 = vpop.f32.mrb[0].mxu0
        %v756 = vadd.f32 %v459, %v755
        %v757 = vpop.f32.mrb[0].mxu0
        %758 = vmatprep.mubr.bf16.mxu0 0
        %759 = vmatmul.mubr.bf16.gmra.mrb[0].mxu0 %v641
        %v760 = vpop.f32.mrb[0].mxu0
        %v761 = vadd.f32 %v464, %v760
        %v762 = vpop.f32.mrb[0].mxu0
        %v763 = vpop.f32.mrb[0].mxu0
        %v764 = vadd.f32 %v467, %v763
        %v765 = vpop.f32.mrb[0].mxu0
        %766 = vmatprep.mubr.bf16.mxu0 0
        %767 = vmatmul.mubr.bf16.gmra.mrb[0].mxu0 %v644
        %v768 = vpop.f32.mrb[0].mxu0
        %v769 = vadd.f32 %v472, %v768
        %v770 = vpop.f32.mrb[0].mxu0
        %v771 = vpop.f32.mrb[0].mxu0
        %v772 = vadd.f32 %v475, %v771
        %v773 = vpop.f32.mrb[0].mxu0
        %774 = vmatprep.mubr.bf16.mxu0 0
        %775 = vmatmul.mubr.bf16.gmra.mrb[0].mxu0 %v647
        %v776 = vpop.f32.mrb[0].mxu0
        %v777 = vadd.f32 %v480, %v776
        %v778 = vpop.f32.mrb[0].mxu0
        %v779 = vpop.f32.mrb[0].mxu0
        %v780 = vadd.f32 %v483, %v779
        %v781 = vpop.f32.mrb[0].mxu0
        %782 = vmatprep.mubr.bf16.mxu0 0
        %783 = vmatmul.mubr.bf16.gmra.mrb[0].mxu0 %v650
        %v784 = vpop.f32.mrb[0].mxu0
        %v785 = vadd.f32 %v488, %v784
        %v786 = vpop.f32.mrb[0].mxu0
        %v787 = vpop.f32.mrb[0].mxu0
        %v788 = vadd.f32 %v491, %v787
        %v789 = vpop.f32.mrb[0].mxu0
        %790 = vmatprep.mubr.bf16.mxu0 0
        %791 = vmatmul.mubr.bf16.gmra.mrb[0].mxu0 %v653
        %v792 = vpop.f32.mrb[0].mxu0
        %v793 = vadd.f32 %v496, %v792
        %v794 = vpop.f32.mrb[0].mxu0
        %v795 = vpop.f32.mrb[0].mxu0
        %v796 = vadd.f32 %v499, %v795
        %v797 = vpop.f32.mrb[0].mxu0
        %798 = vmatprep.mubr.bf16.mxu0 0
        %799 = vmatmul.mubr.bf16.gmra.mrb[0].mxu0 %v656
        %v800 = vpop.f32.mrb[0].mxu0
        %v801 = vadd.f32 %v504, %v800
        %v802 = vpop.f32.mrb[0].mxu0
        %v803 = vpop.f32.mrb[0].mxu0
        %v804 = vadd.f32 %v507, %v803
        %v805 = vpop.f32.mrb[0].mxu0
        %806 = vmatprep.mubr.bf16.mxu0 0
        %807 = vmatmul.mubr.bf16.gmra.mrb[0].mxu0 %v659
        %v808 = vpop.f32.mrb[0].mxu0
        %v809 = vadd.f32 %v512, %v808
        %v810 = vpop.f32.mrb[0].mxu0
        %v811 = vpop.f32.mrb[0].mxu0
        %v812 = vadd.f32 %v515, %v811
        %v813 = vpop.f32.mrb[0].mxu0
        %814 = vmatprep.mubr.bf16.mxu0 0
        %815 = vmatmul.mubr.bf16.gmra.mrb[0].mxu0 %v662
        %v816 = vpop.f32.mrb[0].mxu0
        %v817 = vadd.f32 %v520, %v816
        %v818 = vpop.f32.mrb[0].mxu0
        %v819 = vpop.f32.mrb[0].mxu0
        %v820 = vadd.f32 %v523, %v819
        %v821 = vpop.f32.mrb[0].mxu0
        %822 = vmatprep.mubr.bf16.mxu0 0
        %823 = vmatmul.mubr.bf16.gmra.mrb[0].mxu0 %v665
        %v824 = vpop.f32.mrb[0].mxu0
        %v825 = vadd.f32 %v528, %v824
        %v826 = vpop.f32.mrb[0].mxu0
        %v827 = vpop.f32.mrb[0].mxu0
        %v828 = vadd.f32 %v531, %v827
        %v829 = vpop.f32.mrb[0].mxu0
        %830 = vdwg.mxu0
        %s831 = sadd.s32 %s158, 2
        %s832 = smul.u32 %s831, 2
        %s833 = smul.addr %s832, 4
        %s834 = scalar_lea.vmem %s155, %s833
        %v835 = vld [vmem:[%s834] sm:$0xf]
        %v836 = vld [vmem:[%s834 + $0x4] sm:$0xf]
        %v837 = vld [vmem:[%s834 + $0x8] sm:$0xf]
        %v838 = vld [vmem:[%s834 + $0xc] sm:$0xf]
        %v839 = vld [vmem:[%s834 + $0x10] sm:$0xf]
        %v840 = vld [vmem:[%s834 + $0x14] sm:$0xf]
        %v841 = vld [vmem:[%s834 + $0x18] sm:$0xf]
        %v842 = vld [vmem:[%s834 + $0x1c] sm:$0xf]
        %v843 = vld [vmem:[%s834 + $0x20] sm:$0xf]
        %v844 = vld [vmem:[%s834 + $0x24] sm:$0xf]
        %v845 = vld [vmem:[%s834 + $0x28] sm:$0xf]
        %v846 = vld [vmem:[%s834 + $0x2c] sm:$0xf]
        %v847 = vld [vmem:[%s834 + $0x30] sm:$0xf]
        %v848 = vld [vmem:[%s834 + $0x34] sm:$0xf]
        %v849 = vld [vmem:[%s834 + $0x38] sm:$0xf]
        %v850 = vld [vmem:[%s834 + $0x3c] sm:$0xf]
        %v851 = vld [vmem:[%s834 + $0x40] sm:$0xf]
        %v852 = vld [vmem:[%s834 + $0x44] sm:$0xf]
        %v853 = vld [vmem:[%s834 + $0x48] sm:$0xf]
        %v854 = vld [vmem:[%s834 + $0x4c] sm:$0xf]
        %v855 = vld [vmem:[%s834 + $0x50] sm:$0xf]
        %v856 = vld [vmem:[%s834 + $0x54] sm:$0xf]
        %v857 = vld [vmem:[%s834 + $0x58] sm:$0xf]
        %v858 = vld [vmem:[%s834 + $0x5c] sm:$0xf]
        %v859 = vld [vmem:[%s834 + $0x60] sm:$0xf]
        %v860 = vld [vmem:[%s834 + $0x64] sm:$0xf]
        %v861 = vld [vmem:[%s834 + $0x68] sm:$0xf]
        %v862 = vld [vmem:[%s834 + $0x6c] sm:$0xf]
        %v863 = vld [vmem:[%s834 + $0x70] sm:$0xf]
        %v864 = vld [vmem:[%s834 + $0x74] sm:$0xf]
        %v865 = vld [vmem:[%s834 + $0x78] sm:$0xf]
        %v866 = vld [vmem:[%s834 + $0x7c] sm:$0xf]
        %s867 = scalar_lea.vmem %s1, 16
        %v868 = vld [vmem:[%s867] sm:$0xf]
        %v869 = vld [vmem:[%s867 + $0x4] sm:$0x3]
        %v902 = vunpack.c.l.b16 %v835
        %v903 = vunpack.c.l.b16 %v836
        %v904 = vunpack.c.l.b16 %v837
        %v905 = vunpack.c.l.b16 %v838
        %v906 = vunpack.c.l.b16 %v839
        %v907 = vunpack.c.l.b16 %v840
        %v908 = vunpack.c.l.b16 %v841
        %v909 = vunpack.c.l.b16 %v842
        %v910 = vunpack.c.l.b16 %v843
        %v911 = vunpack.c.l.b16 %v844
        %v912 = vunpack.c.l.b16 %v845
        %v913 = vunpack.c.l.b16 %v846
        %v914 = vunpack.c.l.b16 %v847
        %v915 = vunpack.c.l.b16 %v848
        %v916 = vunpack.c.l.b16 %v849
        %v917 = vunpack.c.l.b16 %v850
        %v918 = vunpack.c.l.b16 %v851
        %v919 = vunpack.c.l.b16 %v852
        %v920 = vunpack.c.l.b16 %v853
        %v921 = vunpack.c.l.b16 %v854
        %v922 = vunpack.c.l.b16 %v855
        %v923 = vunpack.c.l.b16 %v856
        %v924 = vunpack.c.l.b16 %v857
        %v925 = vunpack.c.l.b16 %v858
        %v926 = vunpack.c.l.b16 %v859
        %v927 = vunpack.c.l.b16 %v860
        %v928 = vunpack.c.l.b16 %v861
        %v929 = vunpack.c.l.b16 %v862
        %v930 = vunpack.c.l.b16 %v863
        %v931 = vunpack.c.l.b16 %v864
        %v932 = vunpack.c.l.b16 %v865
        %v933 = vunpack.c.l.b16 %v866
        %v934 = vpack.c.b16 %v903, %v902
        %v935 = vpack.c.b16 %v905, %v904
        %v936 = vpack.c.b16 %v907, %v906
        %v937 = vpack.c.b16 %v909, %v908
        %v938 = vpack.c.b16 %v911, %v910
        %v939 = vpack.c.b16 %v913, %v912
        %v940 = vpack.c.b16 %v915, %v914
        %v941 = vpack.c.b16 %v917, %v916
        %v942 = vpack.c.b16 %v919, %v918
        %v943 = vpack.c.b16 %v921, %v920
        %v944 = vpack.c.b16 %v923, %v922
        %v945 = vpack.c.b16 %v925, %v924
        %v946 = vpack.c.b16 %v927, %v926
        %v947 = vpack.c.b16 %v929, %v928
        %v948 = vpack.c.b16 %v931, %v930
        %v949 = vpack.c.b16 %v933, %v932
        %v952 = vunpack.c.l.b16 %v868
        %v953 = vunpack.c.l.b16 %v869
        %v954 = vpack.c.b16 %v953, %v952
        %v956 = vsel %vm320, %v934, 0
        %v959 = vsel %vm320, %v935, 0
        %v962 = vsel %vm320, %v936, 0
        %v965 = vsel %vm320, %v937, 0
        %v968 = vsel %vm320, %v938, 0
        %v971 = vsel %vm320, %v939, 0
        %v974 = vsel %vm320, %v940, 0
        %v977 = vsel %vm320, %v941, 0
        %v980 = vsel %vm320, %v942, 0
        %v983 = vsel %vm320, %v943, 0
        %v986 = vsel %vm320, %v944, 0
        %v989 = vsel %vm320, %v945, 0
        %v992 = vsel %vm320, %v946, 0
        %v995 = vsel %vm320, %v947, 0
        %v998 = vsel %vm320, %v948, 0
        %v1001 = vsel %vm320, %v949, 0
        %v1004 = vsel %vm369, %v954, 0
        %1006 = vmatprep.subr.bf16.mxu0 0
        %1007 = vmatpush1.bf16.msra.mxu0 %v1004
        %1008 = vmatprep.subr.bf16.mxu0 0
        %1009 = vmatpush1.bf16.msra.mxu0 0
        %1010 = vmatprep.subr.bf16.mxu0 0
        %1011 = vmatpush1.bf16.msra.mxu0 0
        %1012 = vmatprep.subr.bf16.mxu0 0
        %1013 = vmatpush1.bf16.msra.mxu0 0
        %1014 = vmatprep.subr.bf16.mxu0 0
        %1015 = vmatpush1.bf16.msra.mxu0 0
        %1016 = vmatprep.subr.bf16.mxu0 0
        %1017 = vmatpush1.bf16.msra.mxu0 0
        %1018 = vmatprep.subr.bf16.mxu0 0
        %1019 = vmatpush1.bf16.msra.mxu0 0
        %1020 = vmatprep.subr.bf16.mxu0 0
        %1021 = vmatpush1.bf16.msra.mxu0 0
        %1022 = vmatprep.subr.bf16.mxu0 0
        %1023 = vmatpush1.bf16.msra.mxu0 0
        %1024 = vmatprep.subr.bf16.mxu0 0
        %1025 = vmatpush1.bf16.msra.mxu0 0
        %1026 = vmatprep.subr.bf16.mxu0 0
        %1027 = vmatpush1.bf16.msra.mxu0 0
        %1028 = vmatprep.subr.bf16.mxu0 0
        %1029 = vmatpush1.bf16.msra.mxu0 0
        %1030 = vmatprep.subr.bf16.mxu0 0
        %1031 = vmatpush1.bf16.msra.mxu0 0
        %1032 = vmatprep.subr.bf16.mxu0 0
        %1033 = vmatpush1.bf16.msra.mxu0 0
        %1034 = vmatprep.subr.bf16.mxu0 0
        %1035 = vmatpush1.bf16.msra.mxu0 0
        %1036 = vmatprep.subr.bf16.mxu0 0
        %1037 = vmatpush1.bf16.msra.mxu0 0
        %1038 = vmatprep.mubr.bf16.mxu0 0
        %1039 = vmatmul.mubr.bf16.gmra.mrb[0].mxu0 %v956
        %v1040 = vpop.f32.mrb[0].mxu0
        %v1041 = vadd.f32 0.0, %v1040
        %v1042 = vpop.f32.mrb[0].mxu0
        %v1043 = vpop.f32.mrb[0].mxu0
        %v1044 = vadd.f32 0.0, %v1043
        %v1045 = vpop.f32.mrb[0].mxu0
        %1046 = vmatprep.mubr.bf16.mxu0 0
        %1047 = vmatmul.mubr.bf16.gmra.mrb[0].mxu0 %v959
        %v1048 = vpop.f32.mrb[0].mxu0
        %v1049 = vadd.f32 0.0, %v1048
        %v1050 = vpop.f32.mrb[0].mxu0
        %v1051 = vpop.f32.mrb[0].mxu0
        %v1052 = vadd.f32 0.0, %v1051
        %v1053 = vpop.f32.mrb[0].mxu0
        %1054 = vmatprep.mubr.bf16.mxu0 0
        %1055 = vmatmul.mubr.bf16.gmra.mrb[0].mxu0 %v962
        %v1056 = vpop.f32.mrb[0].mxu0
        %v1057 = vadd.f32 0.0, %v1056
        %v1058 = vpop.f32.mrb[0].mxu0
        %v1059 = vpop.f32.mrb[0].mxu0
        %v1060 = vadd.f32 0.0, %v1059
        %v1061 = vpop.f32.mrb[0].mxu0
        %1062 = vmatprep.mubr.bf16.mxu0 0
        %1063 = vmatmul.mubr.bf16.gmra.mrb[0].mxu0 %v965
        %v1064 = vpop.f32.mrb[0].mxu0
        %v1065 = vadd.f32 0.0, %v1064
        %v1066 = vpop.f32.mrb[0].mxu0
        %v1067 = vpop.f32.mrb[0].mxu0
        %v1068 = vadd.f32 0.0, %v1067
        %v1069 = vpop.f32.mrb[0].mxu0
        %1070 = vmatprep.mubr.bf16.mxu0 0
        %1071 = vmatmul.mubr.bf16.gmra.mrb[0].mxu0 %v968
        %v1072 = vpop.f32.mrb[0].mxu0
        %v1073 = vadd.f32 0.0, %v1072
        %v1074 = vpop.f32.mrb[0].mxu0
        %v1075 = vpop.f32.mrb[0].mxu0
        %v1076 = vadd.f32 0.0, %v1075
        %v1077 = vpop.f32.mrb[0].mxu0
        %1078 = vmatprep.mubr.bf16.mxu0 0
        %1079 = vmatmul.mubr.bf16.gmra.mrb[0].mxu0 %v971
        %v1080 = vpop.f32.mrb[0].mxu0
        %v1081 = vadd.f32 0.0, %v1080
        %v1082 = vpop.f32.mrb[0].mxu0
        %v1083 = vpop.f32.mrb[0].mxu0
        %v1084 = vadd.f32 0.0, %v1083
        %v1085 = vpop.f32.mrb[0].mxu0
        %1086 = vmatprep.mubr.bf16.mxu0 0
        %1087 = vmatmul.mubr.bf16.gmra.mrb[0].mxu0 %v974
        %v1088 = vpop.f32.mrb[0].mxu0
        %v1089 = vadd.f32 0.0, %v1088
        %v1090 = vpop.f32.mrb[0].mxu0
        %v1091 = vpop.f32.mrb[0].mxu0
        %v1092 = vadd.f32 0.0, %v1091
        %v1093 = vpop.f32.mrb[0].mxu0
        %1094 = vmatprep.mubr.bf16.mxu0 0
        %1095 = vmatmul.mubr.bf16.gmra.mrb[0].mxu0 %v977
        %v1096 = vpop.f32.mrb[0].mxu0
        %v1097 = vadd.f32 0.0, %v1096
        %v1098 = vpop.f32.mrb[0].mxu0
        %v1099 = vpop.f32.mrb[0].mxu0
        %v1100 = vadd.f32 0.0, %v1099
        %v1101 = vpop.f32.mrb[0].mxu0
        %1102 = vmatprep.mubr.bf16.mxu0 0
        %1103 = vmatmul.mubr.bf16.gmra.mrb[0].mxu0 %v980
        %v1104 = vpop.f32.mrb[0].mxu0
        %v1105 = vadd.f32 0.0, %v1104
        %v1106 = vpop.f32.mrb[0].mxu0
        %v1107 = vpop.f32.mrb[0].mxu0
        %v1108 = vadd.f32 0.0, %v1107
        %v1109 = vpop.f32.mrb[0].mxu0
        %1110 = vmatprep.mubr.bf16.mxu0 0
        %1111 = vmatmul.mubr.bf16.gmra.mrb[0].mxu0 %v983
        %v1112 = vpop.f32.mrb[0].mxu0
        %v1113 = vadd.f32 0.0, %v1112
        %v1114 = vpop.f32.mrb[0].mxu0
        %v1115 = vpop.f32.mrb[0].mxu0
        %v1116 = vadd.f32 0.0, %v1115
        %v1117 = vpop.f32.mrb[0].mxu0
        %1118 = vmatprep.mubr.bf16.mxu0 0
        %1119 = vmatmul.mubr.bf16.gmra.mrb[0].mxu0 %v986
        %v1120 = vpop.f32.mrb[0].mxu0
        %v1121 = vadd.f32 0.0, %v1120
        %v1122 = vpop.f32.mrb[0].mxu0
        %v1123 = vpop.f32.mrb[0].mxu0
        %v1124 = vadd.f32 0.0, %v1123
        %v1125 = vpop.f32.mrb[0].mxu0
        %1126 = vmatprep.mubr.bf16.mxu0 0
        %1127 = vmatmul.mubr.bf16.gmra.mrb[0].mxu0 %v989
        %v1128 = vpop.f32.mrb[0].mxu0
        %v1129 = vadd.f32 0.0, %v1128
        %v1130 = vpop.f32.mrb[0].mxu0
        %v1131 = vpop.f32.mrb[0].mxu0
        %v1132 = vadd.f32 0.0, %v1131
        %v1133 = vpop.f32.mrb[0].mxu0
        %1134 = vmatprep.mubr.bf16.mxu0 0
        %1135 = vmatmul.mubr.bf16.gmra.mrb[0].mxu0 %v992
        %v1136 = vpop.f32.mrb[0].mxu0
        %v1137 = vadd.f32 0.0, %v1136
        %v1138 = vpop.f32.mrb[0].mxu0
        %v1139 = vpop.f32.mrb[0].mxu0
        %v1140 = vadd.f32 0.0, %v1139
        %v1141 = vpop.f32.mrb[0].mxu0
        %1142 = vmatprep.mubr.bf16.mxu0 0
        %1143 = vmatmul.mubr.bf16.gmra.mrb[0].mxu0 %v995
        %v1144 = vpop.f32.mrb[0].mxu0
        %v1145 = vadd.f32 0.0, %v1144
        %v1146 = vpop.f32.mrb[0].mxu0
        %v1147 = vpop.f32.mrb[0].mxu0
        %v1148 = vadd.f32 0.0, %v1147
        %v1149 = vpop.f32.mrb[0].mxu0
        %1150 = vmatprep.mubr.bf16.mxu0 0
        %1151 = vmatmul.mubr.bf16.gmra.mrb[0].mxu0 %v998
        %v1152 = vpop.f32.mrb[0].mxu0
        %v1153 = vadd.f32 0.0, %v1152
        %v1154 = vpop.f32.mrb[0].mxu0
        %v1155 = vpop.f32.mrb[0].mxu0
        %v1156 = vadd.f32 0.0, %v1155
        %v1157 = vpop.f32.mrb[0].mxu0
        %1158 = vmatprep.mubr.bf16.mxu0 0
        %1159 = vmatmul.mubr.bf16.gmra.mrb[0].mxu0 %v1001
        %v1160 = vpop.f32.mrb[0].mxu0
        %v1161 = vadd.f32 0.0, %v1160
        %v1162 = vpop.f32.mrb[0].mxu0
        %v1163 = vpop.f32.mrb[0].mxu0
        %v1164 = vadd.f32 0.0, %v1163
        %v1165 = vpop.f32.mrb[0].mxu0
        %1166 = vdwg.mxu0
        %v1167 = vadd.f32 %v705, %v1041
        %v1168 = vadd.f32 %v708, %v1044
        %v1169 = vadd.f32 %v713, %v1049
        %v1170 = vadd.f32 %v716, %v1052
        %v1171 = vadd.f32 %v721, %v1057
        %v1172 = vadd.f32 %v724, %v1060
        %v1173 = vadd.f32 %v729, %v1065
        %v1174 = vadd.f32 %v732, %v1068
        %v1175 = vadd.f32 %v737, %v1073
        %v1176 = vadd.f32 %v740, %v1076
        %v1177 = vadd.f32 %v745, %v1081
        %v1178 = vadd.f32 %v748, %v1084
        %v1179 = vadd.f32 %v753, %v1089
        %v1180 = vadd.f32 %v756, %v1092
        %v1181 = vadd.f32 %v761, %v1097
        %v1182 = vadd.f32 %v764, %v1100
        %v1183 = vadd.f32 %v769, %v1105
        %v1184 = vadd.f32 %v772, %v1108
        %v1185 = vadd.f32 %v777, %v1113
        %v1186 = vadd.f32 %v780, %v1116
        %v1187 = vadd.f32 %v785, %v1121
        %v1188 = vadd.f32 %v788, %v1124
        %v1189 = vadd.f32 %v793, %v1129
        %v1190 = vadd.f32 %v796, %v1132
        %v1191 = vadd.f32 %v801, %v1137
        %v1192 = vadd.f32 %v804, %v1140
        %v1193 = vadd.f32 %v809, %v1145
        %v1194 = vadd.f32 %v812, %v1148
        %v1195 = vadd.f32 %v817, %v1153
        %v1196 = vadd.f32 %v820, %v1156
        %v1197 = vadd.f32 %v825, %v1161
        %v1198 = vadd.f32 %v828, %v1164
        %1199 = vst [vmem:[%s150] sm:$0xff] 0.0
        %v1200 = vadd.f32 %v1167, %v1168
        %v1201 = vadd.f32 %v1200, %v1169
        %v1202 = vadd.f32 %v1201, %v1170
        %v1203 = vadd.f32 %v1202, %v1171
        %v1204 = vadd.f32 %v1203, %v1172
        %v1205 = vadd.f32 %v1204, %v1173
        %v1206 = vadd.f32 %v1205, %v1174
        %v1207 = vadd.f32 %v1206, %v1175
        %v1208 = vadd.f32 %v1207, %v1176
        %v1209 = vadd.f32 %v1208, %v1177
        %v1210 = vadd.f32 %v1209, %v1178
        %v1211 = vadd.f32 %v1210, %v1179
        %v1212 = vadd.f32 %v1211, %v1180
        %v1213 = vadd.f32 %v1212, %v1181
        %v1214 = vadd.f32 %v1213, %v1182
        %v1215 = vadd.f32 %v1214, %v1183
        %v1216 = vadd.f32 %v1215, %v1184
        %v1217 = vadd.f32 %v1216, %v1185
        %v1218 = vadd.f32 %v1217, %v1186
        %v1219 = vadd.f32 %v1218, %v1187
        %v1220 = vadd.f32 %v1219, %v1188
        %v1221 = vadd.f32 %v1220, %v1189
        %v1222 = vadd.f32 %v1221, %v1190
        %v1223 = vadd.f32 %v1222, %v1191
        %v1224 = vadd.f32 %v1223, %v1192
        %v1225 = vadd.f32 %v1224, %v1193
        %v1226 = vadd.f32 %v1225, %v1194
        %v1227 = vadd.f32 %v1226, %v1195
        %v1228 = vadd.f32 %v1227, %v1196
        %v1229 = vadd.f32 %v1228, %v1197
        %v1230 = vadd.f32 %v1229, %v1198
        %v1231 = vrot.slane %v1230, 4
        %v1232 = vadd.f32 %v1230, %v1231
        %v1233 = vrot.slane %v1232, 2
        %v1234 = vadd.f32 %v1232, %v1233
        %v1235 = vrot.slane %v1234, 1
        %v1236 = vadd.f32 %v1234, %v1235
        %1237 = vst [vmem:[%s150] sm:$0x1] %v1236
        %v1238 = vmul.f32 %v1167, %v1167
        %v1239 = vmul.f32 %v1168, %v1168
        %v1240 = vmul.f32 %v1169, %v1169
        %v1241 = vmul.f32 %v1170, %v1170
        %v1242 = vmul.f32 %v1171, %v1171
        %v1243 = vmul.f32 %v1172, %v1172
        %v1244 = vmul.f32 %v1173, %v1173
        %v1245 = vmul.f32 %v1174, %v1174
        %v1246 = vmul.f32 %v1175, %v1175
        %v1247 = vmul.f32 %v1176, %v1176
        %v1248 = vmul.f32 %v1177, %v1177
        %v1249 = vmul.f32 %v1178, %v1178
        %v1250 = vmul.f32 %v1179, %v1179
        %v1251 = vmul.f32 %v1180, %v1180
        %v1252 = vmul.f32 %v1181, %v1181
        %v1253 = vmul.f32 %v1182, %v1182
        %v1254 = vmul.f32 %v1183, %v1183
        %v1255 = vmul.f32 %v1184, %v1184
        %v1256 = vmul.f32 %v1185, %v1185
        %v1257 = vmul.f32 %v1186, %v1186
        %v1258 = vmul.f32 %v1187, %v1187
        %v1259 = vmul.f32 %v1188, %v1188
        %v1260 = vmul.f32 %v1189, %v1189
        %v1261 = vmul.f32 %v1190, %v1190
        %v1262 = vmul.f32 %v1191, %v1191
        %v1263 = vmul.f32 %v1192, %v1192
        %v1264 = vmul.f32 %v1193, %v1193
        %v1265 = vmul.f32 %v1194, %v1194
        %v1266 = vmul.f32 %v1195, %v1195
        %v1267 = vmul.f32 %v1196, %v1196
        %v1268 = vmul.f32 %v1197, %v1197
        %v1269 = vmul.f32 %v1198, %v1198
        %v1270 = vadd.f32 %v1238, %v1239
        %v1271 = vadd.f32 %v1270, %v1240
        %v1272 = vadd.f32 %v1271, %v1241
        %v1273 = vadd.f32 %v1272, %v1242
        %v1274 = vadd.f32 %v1273, %v1243
        %v1275 = vadd.f32 %v1274, %v1244
        %v1276 = vadd.f32 %v1275, %v1245
        %v1277 = vadd.f32 %v1276, %v1246
        %v1278 = vadd.f32 %v1277, %v1247
        %v1279 = vadd.f32 %v1278, %v1248
        %v1280 = vadd.f32 %v1279, %v1249
        %v1281 = vadd.f32 %v1280, %v1250
        %v1282 = vadd.f32 %v1281, %v1251
        %v1283 = vadd.f32 %v1282, %v1252
        %v1284 = vadd.f32 %v1283, %v1253
        %v1285 = vadd.f32 %v1284, %v1254
        %v1286 = vadd.f32 %v1285, %v1255
        %v1287 = vadd.f32 %v1286, %v1256
        %v1288 = vadd.f32 %v1287, %v1257
        %v1289 = vadd.f32 %v1288, %v1258
        %v1290 = vadd.f32 %v1289, %v1259
        %v1291 = vadd.f32 %v1290, %v1260
        %v1292 = vadd.f32 %v1291, %v1261
        %v1293 = vadd.f32 %v1292, %v1262
        %v1294 = vadd.f32 %v1293, %v1263
        %v1295 = vadd.f32 %v1294, %v1264
        %v1296 = vadd.f32 %v1295, %v1265
        %v1297 = vadd.f32 %v1296, %v1266
        %v1298 = vadd.f32 %v1297, %v1267
        %v1299 = vadd.f32 %v1298, %v1268
        %v1300 = vadd.f32 %v1299, %v1269
        %v1301 = vrot.slane %v1300, 4
        %v1302 = vadd.f32 %v1300, %v1301
        %v1303 = vrot.slane %v1302, 2
        %v1304 = vadd.f32 %v1302, %v1303
        %v1305 = vrot.slane %v1304, 1
        %v1306 = vadd.f32 %v1304, %v1305
        %1307 = vst [vmem:[%s150 + $0x1] sm:$0x1] %v1306
        %s1308 = sand.u32 %s85, 1
        %s1309 = scalar_lea.sflag [#allocation3], %s1308
        %s1310 = sand.u32 %s85, 1
        %s1311 = smul.addr %s1310, 8
        %s1312 = scalar_lea.vmem [#allocation2], %s1311
        // Predicated region
        $region29: #{tpu_custom_call.1} parent=27 // pred_check
          %p1313 = pneg %p95
        $region30: #{tpu_custom_call.1} parent=27 // pred_check_branch
          %1315 = sbr.rel (%p1313) target = $region32
        $region31: #{tpu_custom_call.1} parent=27 // pred_region
          %s1316 = sadd.s32 %s20, %s21
          %s1318 = ssub.s32 128, 128
          %1319 = vsyncadd %s1309, %s1318
          %s1320 = smul.addr %s1316, 128
          %s1321 = scalar_lea.hbm %s2, %s1320
          %s1323 = sshll.u32 %s1312, 4
          %s1324 = int_to_ptr.vmem [resolvable:$true] %s1323
          %1326 = dma.vmem_to_hbm [thread:$0]  %s1324, 128, %s1321, %s1309
        $region32: #{tpu_custom_call.1} parent=27 // pred_fallthru
          _
      $region28: #{tpu_custom_call.1} parent=5 // pred_fallthru
        _
      %p1327 = scmp.le.s32.totalorder 2, %s11
      // Predicated region
      $region33: #{tpu_custom_call.1} parent=5 // pred_check
        %p1328 = pneg %p1327
      $region34: #{tpu_custom_call.1} parent=5 // pred_check_branch
        %1330 = sbr.rel (%p1328) target = $region36
      $region35: #{tpu_custom_call.1} parent=5 // pred_region
        %s1331 = ssub.s32 %s11, 2
        // Predicated region
        $region37: #{tpu_custom_call.1} parent=35 // pred_check
          %p1332 = pneg %p101
        $region38: #{tpu_custom_call.1} parent=35 // pred_check_branch
          %1334 = sbr.rel (%p1332) target = $region40
        $region39: #{tpu_custom_call.1} parent=35 // pred_region
          %s1335 = sand.u32 %s86, 1
          %s1336 = scalar_lea.sflag [#allocation3], %s1335
          %s1337 = sand.u32 %s86, 1
          %s1338 = smul.addr %s1337, 8
          %s1339 = scalar_lea.vmem [#allocation2], %s1338
          %1340 = dma.done %s1336, 128
        $region40: #{tpu_custom_call.1} parent=35 // pred_fallthru
          _
      $region36: #{tpu_custom_call.1} parent=5 // pred_fallthru
        _
    $region6: #{tpu_custom_call.1} parent=1 // loop_footer
      %s15 = sadd.s32 1, %s11
    $region7: #{tpu_custom_call.1} parent=1 // loop_footer_branch
      %10 = sbr.rel target = $region3
    $region8: #{tpu_custom_call.1} parent=1 // loop_exit
      _
    %1341 = vsyncpa [#allocation3], 1
    %s1342 = scalar_lea.sflag [#allocation3], 1
    %1343 = vsyncpa %s1342, 1

</llo_original>
